<compile_context>
chip_gen: v7x
topology: tpu7x:2x2x1
jax: 0.10.0
libtpu: 0.0.40
codegen_flags: <defaults>
</compile_context>

<pallas_src>
import functools

import jax
import jax.numpy as jnp
from jax.experimental import pallas as pl
from jax.experimental.pallas import tpu as pltpu


def _round_up(x, m):
    return ((x + m - 1) // m) * m


def _vmem_capacity_bytes():
    """Per-generation VMEM capacity; conservative fallback if the query fails."""
    try:
        info = pltpu.get_tpu_info()
        cap = int(getattr(info, "vmem_capacity_bytes", 0))
        if cap > 0:
            return cap
    except Exception:
        pass
    return 64 << 20  # v7x per-TC VMEM; safe lower bound for v5e/v6e as well


def _pick_tn(hid_pad, limit):
    """Largest multiple of 128 that divides hid_pad and is <= limit (min 128)."""
    best = 128
    for d in range(1, hid_pad // 128 + 1):
        cand = 128 * d
        if hid_pad % cand == 0 and cand <= limit:
            best = cand
    return best


def _encoder_kernel(x_ref, w1_ref, b1_ref, w2_ref, b2_ref, o_ref, h_ref):
    """Grid = (batch_tiles, n_tiles over fc2 output columns)."""
    j = pl.program_id(1)

    # fc1 -> ReLU: computed once per batch tile (j == 0), kept in VMEM scratch and
    # reused for every N-tile of fc2.
    @pl.when(j == 0)
    def _():
        h = jnp.dot(x_ref[...], w1_ref[...], preferred_element_type=jnp.float32)
        h = jnp.maximum(h + b1_ref[...], 0.0)
        h_ref[...] = h.astype(h_ref.dtype)

    # fc2 (N-tile) -> ReLU
    y = jnp.dot(h_ref[...], w2_ref[...], preferred_element_type=jnp.float32)
    y = jnp.maximum(y + b2_ref[...], 0.0)
    o_ref[...] = y.astype(o_ref.dtype)


def prepare_table_encoder_params(w1, b1, w2, b2, *, compute_dtype=jnp.bfloat16):
    """Pad/cast the weights ONCE (hoisted out of the per-call path).

    w1: (input_dim, hidden_dim)   b1: (hidden_dim,) or (1, hidden_dim)
    w2: (hidden_dim, hidden_dim)  b2: (hidden_dim,) or (1, hidden_dim)
    Weights are stored transposed vs. torch.nn.Linear so the MXU computes x @ W.
    """
    cdt = jnp.dtype(compute_dtype)
    in_dim, hidden = w1.shape
    in_pad = _round_up(in_dim, 128)
    hid_pad = _round_up(hidden, 128)

    b1 = jnp.asarray(b1).reshape(1, -1)
    b2 = jnp.asarray(b2).reshape(1, -1)

    w1p = jnp.pad(w1, ((0, in_pad - in_dim), (0, hid_pad - hidden))).astype(cdt)
    w2p = jnp.pad(w2, ((0, hid_pad - hidden), (0, hid_pad - hidden))).astype(cdt)
    b1p = jnp.pad(b1, ((0, 0), (0, hid_pad - hidden))).astype(jnp.float32)
    b2p = jnp.pad(b2, ((0, 0), (0, hid_pad - hidden))).astype(jnp.float32)

    return {"w1": w1p, "b1": b1p, "w2": w2p, "b2": b2p,
            "in_dim": in_dim, "hidden": hidden}


@functools.partial(
    jax.jit,
    static_argnames=("in_dim", "hidden", "block_b", "block_n", "out_dtype"))
def _table_data_encoder_padded(x, w1p, b1p, w2p, b2p, *, in_dim, hidden,
                               block_b=512, block_n=512, out_dtype=None):
    assert x.shape[1] == in_dim, "x feature dim does not match prepared params"
    B = x.shape[0]
    in_pad, hid_pad = w1p.shape
    cdt = w1p.dtype
    out_dtype = jnp.dtype(out_dtype) if out_dtype is not None else x.dtype
    itm = cdt.itemsize
    out_itm = jnp.dtype(out_dtype).itemsize

    # Batch tile: multiple of 16 (bf16 sublane pack). For large batches, ensure at
    # least 2 batch tiles so the "parallel" axis can be split across v7x's 2 TCs.
    bb = _round_up(min(block_b, _round_up(B, 16)), 16)
    if B > 256 and -(-_round_up(B, 16) // bb) < 2:
        bb = _round_up(-(-B // 2), 16)

    # Per-generation VMEM budget (capacity minus headroom for compiler scratch).
    budget = max(_vmem_capacity_bytes() - (16 << 20), 24 << 20)

    def vmem_need(bb_, tn_):
        w2_bufs = 1 if hid_pad // tn_ == 1 else 2
        return (2 * bb_ * in_pad * itm            # x tiles (double-buffered)
                + in_pad * hid_pad * itm          # w1 (constant index, Buffered(1))
                + 8 * hid_pad * 4                 # b1 f32 (Buffered(1), sublane-padded)
                + w2_bufs * hid_pad * tn_ * itm   # w2 N-tiles (or resident)
                + w2_bufs * 8 * tn_ * 4           # b2 f32
                + 2 * bb_ * tn_ * out_itm         # out tiles
                + bb_ * hid_pad * itm)            # fc1 activation scratch

    # Prefer resident w2 (DMA'd exactly once); otherwise N-tile and shrink bb / tn
    # until the footprint fits the budget, or fail loudly.
    tn = hid_pad
    if vmem_need(bb, tn) > budget:
        tn = _pick_tn(hid_pad, min(block_n, hid_pad))
    while vmem_need(bb, tn) > budget:
        if bb > 16:
            bb = max(16, _round_up(bb // 2, 16))
        elif tn > 128:
            tn = _pick_tn(hid_pad, tn // 2)
        else:
            raise ValueError(
                "TableDataEncoder tile footprint exceeds the VMEM budget "
                f"({vmem_need(bb, tn)} > {budget} bytes); reduce input/hidden dims.")

    B_pad = _round_up(B, bb)
    n_batch_tiles = B_pad // bb
    n_tiles = hid_pad // tn
    w2_resident = n_tiles == 1

    # Pad / cast x only when needed (weights are already prepared).
    if (B_pad, in_pad) != tuple(x.shape) or x.dtype != cdt:
        xp = jnp.pad(x, ((0, B_pad - B), (0, in_pad - x.shape[1]))).astype(cdt)
    else:
        xp = x

    vmem_limit = int(min(max(vmem_need(bb, tn) + (4 << 20), 32 << 20), budget))

    w2_reads = 1 if w2_resident else n_batch_tiles
    cost = pl.CostEstimate(
        flops=2 * B_pad * in_pad * hid_pad + 2 * B_pad * hid_pad * hid_pad,
        transcendentals=0,
        bytes_accessed=int(xp.size * itm + w1p.size * itm + b1p.size * 4
                           + (w2p.size * itm + b2p.size * 4) * w2_reads
                           + B_pad * hid_pad * out_itm),
    )

    const_mode = pl.Buffered(1)                       # single-buffer constant blocks
    w2_mode = pl.Buffered(1) if w2_resident else None  # default (double) when N-tiled

    in_specs = [
        pl.BlockSpec((bb, in_pad), lambda i, j: (i, 0)),                  # x tile
        pl.BlockSpec((in_pad, hid_pad), lambda i, j: (0, 0),
                     pipeline_mode=const_mode),                            # w1
        pl.BlockSpec((1, hid_pad), lambda i, j: (0, 0),
                     pipeline_mode=const_mode),                            # b1
        pl.BlockSpec((hid_pad, tn), lambda i, j: (0, j),
                     pipeline_mode=w2_mode),                               # w2
        pl.BlockSpec((1, tn), lambda i, j: (0, j),
                     pipeline_mode=w2_mode),                               # b2
    ]

    out = pl.pallas_call(
        _encoder_kernel,
        out_shape=jax.ShapeDtypeStruct((B_pad, hid_pad), out_dtype),
        grid_spec=pltpu.PrefetchScalarGridSpec(
            num_scalar_prefetch=0,
            grid=(n_batch_tiles, n_tiles),
            in_specs=in_specs,
            out_specs=pl.BlockSpec((bb, tn), lambda i, j: (i, j)),
            scratch_shapes=[pltpu.VMEM((bb, hid_pad), cdt)],   # fc1 activation
        ),
        compiler_params=pltpu.CompilerParams(
            dimension_semantics=("parallel", "arbitrary"),
            vmem_limit_bytes=vmem_limit,
        ),
        cost_estimate=cost,
    )(xp, w1p, b1p, w2p, b2p)

    if (B_pad, hid_pad) != (B, hidden):
        out = out[:B, :hidden]
    return out


def table_data_encoder(x, params, *, block_b=512, block_n=512, out_dtype=None):
    """Apply TableDataEncoder; `params` comes from prepare_table_encoder_params."""
    return _table_data_encoder_padded(
        x, params["w1"], params["b1"], params["w2"], params["b2"],
        in_dim=params["in_dim"], hidden=params["hidden"],
        block_b=block_b, block_n=block_n, out_dtype=out_dtype)


if __name__ == "__main__":
    key = jax.random.PRNGKey(0)
    k_x, k_w1, k_b1, k_w2, k_b2 = jax.random.split(key, 5)

    B, input_dim, hidden_dim = 8, 32, 32

    x = jax.random.normal(k_x, (B, input_dim), dtype=jnp.float32)
    # deterministic PyTorch-Linear-like init (uniform in +/- 1/sqrt(fan_in))
    lim1 = 1.0 / (input_dim ** 0.5)
    lim2 = 1.0 / (hidden_dim ** 0.5)
    w1 = jax.random.uniform(k_w1, (input_dim, hidden_dim), jnp.float32, -lim1, lim1)
    b1 = jax.random.uniform(k_b1, (hidden_dim,), jnp.float32, -lim1, lim1)
    w2 = jax.random.uniform(k_w2, (hidden_dim, hidden_dim), jnp.float32, -lim2, lim2)
    b2 = jax.random.uniform(k_b2, (hidden_dim,), jnp.float32, -lim2, lim2)

    # Weight padding / casting hoisted out of the per-call path (done once).
    params = prepare_table_encoder_params(w1, b1, w2, b2)
    out = table_data_encoder(x, params)
    out = jax.block_until_ready(out)

    # Reference 1: bf16 MXU inputs, f32 accumulation (matches kernel precision).
    xb, w1b, w2b = (a.astype(jnp.bfloat16) for a in (x, w1, w2))
    h_ref = jnp.maximum(jnp.dot(xb, w1b, preferred_element_type=jnp.float32) + b1, 0.0)
    ref_bf16 = jnp.maximum(
        jnp.dot(h_ref.astype(jnp.bfloat16), w2b, preferred_element_type=jnp.float32) + b2,
        0.0)
    # Reference 2: pure f32 (loose tolerance, semantic sanity).
    ref_f32 = jnp.maximum(jnp.maximum(x @ w1 + b1, 0.0) @ w2 + b2, 0.0)

    assert out.shape == (B, hidden_dim)
    assert out.dtype == x.dtype
    assert jnp.allclose(out, ref_bf16, atol=2e-3, rtol=2e-3), "mismatch vs bf16 reference"
    assert jnp.allclose(out, ref_f32, atol=1e-1, rtol=1e-1), "mismatch vs f32 reference"

    print("KERNEL_OK")
</pallas_src>

<mosaic_0001>
module attributes {stable_mosaic.version = 11 : i64} {
  func.func @_encoder_kernel(%arg0: i32, %arg1: i32, %arg2: memref<16x128xbf16, #tpu.memory_space<vmem>>, %arg3: memref<128x128xbf16, #tpu.memory_space<vmem>>, %arg4: memref<1x128xf32, #tpu.memory_space<vmem>>, %arg5: memref<128x128xbf16, #tpu.memory_space<vmem>>, %arg6: memref<1x128xf32, #tpu.memory_space<vmem>>, %arg7: memref<16x128xf32, #tpu.memory_space<vmem>>, %arg8: memref<16x128xbf16, #tpu.memory_space<vmem>>) attributes {dimension_semantics = [#tpu.dimension_semantics<parallel>, #tpu.dimension_semantics<arbitrary>], iteration_bounds = array<i64: 1, 1>, scalar_prefetch = 0 : i64, scratch_operands = 1 : i64, tpu.core_type = #tpu.core_type<tc>, window_params = [{transform_indices = @transform_0, window_bounds = array<i64: 16, 128>}, {pipeline_mode = #tpu.pipeline_mode<synchronous>, transform_indices = @transform_1, window_bounds = array<i64: 128, 128>}, {pipeline_mode = #tpu.pipeline_mode<synchronous>, transform_indices = @transform_2, window_bounds = array<i64: 1, 128>}, {pipeline_mode = #tpu.pipeline_mode<synchronous>, transform_indices = @transform_3, window_bounds = array<i64: 128, 128>}, {pipeline_mode = #tpu.pipeline_mode<synchronous>, transform_indices = @transform_4, window_bounds = array<i64: 1, 128>}, {transform_indices = @transform_5, window_bounds = array<i64: 16, 128>}]} {
    %c0_i32 = arith.constant 0 : i32
    %0 = arith.cmpi eq, %arg1, %c0_i32 : i32
    %1 = arith.extui %0 : i1 to i32
    %c0_i32_0 = arith.constant 0 : i32
    %2 = arith.cmpi ne, %1, %c0_i32_0 : i32
    scf.if %2 {
      %c0_9 = arith.constant 0 : index
      %c0_10 = arith.constant 0 : index
      %12 = vector.load %arg2[%c0_9, %c0_10] : memref<16x128xbf16, #tpu.memory_space<vmem>>, vector<16x128xbf16>
      %c0_11 = arith.constant 0 : index
      %c0_12 = arith.constant 0 : index
      %13 = vector.load %arg3[%c0_11, %c0_12] : memref<128x128xbf16, #tpu.memory_space<vmem>>, vector<128x128xbf16>
      %cst_13 = arith.constant dense<0.000000e+00> : vector<16x128xf32>
      %14 = tpu.matmul %12, %13, %cst_13 {dimension_numbers = #tpu.dot_dimension_numbers<[1], [0], [0], [1], [0, 0, 1, 1], [], []>} : vector<16x128xbf16>, vector<128x128xbf16>, vector<16x128xf32> -> vector<16x128xf32>
      %c0_14 = arith.constant 0 : index
      %c0_15 = arith.constant 0 : index
      %15 = vector.load %arg4[%c0_14, %c0_15] : memref<1x128xf32, #tpu.memory_space<vmem>>, vector<1x128xf32>
      %16 = vector.broadcast %15 : vector<1x128xf32> to vector<16x128xf32>
      %17 = arith.addf %14, %16 : vector<16x128xf32>
      %cst_16 = arith.constant 0.000000e+00 : f32
      %18 = vector.broadcast %cst_16 : f32 to vector<16x128xf32>
      %19 = arith.maximumf %17, %18 : vector<16x128xf32>
      %20 = arith.truncf %19 : vector<16x128xf32> to vector<16x128xbf16>
      %c0_17 = arith.constant 0 : index
      %c0_18 = arith.constant 0 : index
      %21 = vector.load %arg8[%c0_17, %c0_18] : memref<16x128xbf16, #tpu.memory_space<vmem>>, vector<16x128xbf16>
      tpu.vector_store %arg8[%c0_17, %c0_18], %20 {strides = array<i32>} : memref<16x128xbf16, #tpu.memory_space<vmem>>, vector<16x128xbf16>,
    } else {
    }
    %c0 = arith.constant 0 : index
    %c0_1 = arith.constant 0 : index
    %3 = vector.load %arg8[%c0, %c0_1] : memref<16x128xbf16, #tpu.memory_space<vmem>>, vector<16x128xbf16>
    %c0_2 = arith.constant 0 : index
    %c0_3 = arith.constant 0 : index
    %4 = vector.load %arg5[%c0_2, %c0_3] : memref<128x128xbf16, #tpu.memory_space<vmem>>, vector<128x128xbf16>
    %cst = arith.constant dense<0.000000e+00> : vector<16x128xf32>
    %5 = tpu.matmul %3, %4, %cst {dimension_numbers = #tpu.dot_dimension_numbers<[1], [0], [0], [1], [0, 0, 1, 1], [], []>} : vector<16x128xbf16>, vector<128x128xbf16>, vector<16x128xf32> -> vector<16x128xf32>
    %c0_4 = arith.constant 0 : index
    %c0_5 = arith.constant 0 : index
    %6 = vector.load %arg6[%c0_4, %c0_5] : memref<1x128xf32, #tpu.memory_space<vmem>>, vector<1x128xf32>
    %7 = vector.broadcast %6 : vector<1x128xf32> to vector<16x128xf32>
    %8 = arith.addf %5, %7 : vector<16x128xf32>
    %cst_6 = arith.constant 0.000000e+00 : f32
    %9 = vector.broadcast %cst_6 : f32 to vector<16x128xf32>
    %10 = arith.maximumf %8, %9 : vector<16x128xf32>
    %c0_7 = arith.constant 0 : index
    %c0_8 = arith.constant 0 : index
    %11 = vector.load %arg7[%c0_7, %c0_8] : memref<16x128xf32, #tpu.memory_space<vmem>>, vector<16x128xf32>
    tpu.vector_store %arg7[%c0_7, %c0_8], %10 {strides = array<i32>} : memref<16x128xf32, #tpu.memory_space<vmem>>, vector<16x128xf32>,
    return
  }
  func.func @transform_0(%arg0: i32, %arg1: i32) -> (i32, i32) {
    %c0_i32 = arith.constant 0 : i32
    %c0_i32_0 = arith.constant 0 : i32
    return %arg0, %c0_i32 : i32, i32
  }
  func.func @transform_1(%arg0: i32, %arg1: i32) -> (i32, i32) {
    %c0_i32 = arith.constant 0 : i32
    %c0_i32_0 = arith.constant 0 : i32
    %c0_i32_1 = arith.constant 0 : i32
    return %c0_i32, %c0_i32_0 : i32, i32
  }
  func.func @transform_2(%arg0: i32, %arg1: i32) -> (i32, i32) {
    %c0_i32 = arith.constant 0 : i32
    %c0_i32_0 = arith.constant 0 : i32
    %c0_i32_1 = arith.constant 0 : i32
    return %c0_i32, %c0_i32_0 : i32, i32
  }
  func.func @transform_3(%arg0: i32, %arg1: i32) -> (i32, i32) {
    %c0_i32 = arith.constant 0 : i32
    %c0_i32_0 = arith.constant 0 : i32
    return %c0_i32, %arg1 : i32, i32
  }
  func.func @transform_4(%arg0: i32, %arg1: i32) -> (i32, i32) {
    %c0_i32 = arith.constant 0 : i32
    %c0_i32_0 = arith.constant 0 : i32
    return %c0_i32, %arg1 : i32, i32
  }
  func.func @transform_5(%arg0: i32, %arg1: i32) -> (i32, i32) {
    %c0_i32 = arith.constant 0 : i32
    return %arg0, %arg1 : i32, i32
  }
}

</mosaic_0001>

<llo_original>
// kernel: _table_data_encoder_padded.1
$region0: #{_table_data_encoder_padded.1}
  #allocation0 [shape = 'u32[]', space=smem, size = 0x4, offset = 0x4, fixed_abs, tag = 'smem constant byte address 0x4 - core index']
  #allocation1 [shape = 'u32[144,128]{1,0:T(1,128)}', space=vmem, size = 0x12000, scoped, tag = 'internal scratch']
  #allocation2 [shape = 'bf16[16,128]{1,0:T(16,128)(2,1)}', space=vmem, size = 0x1000, scoped, tag = 'scratch operand']
  %s0 = inlined_call_operand.vmem [shape: bf16[16,128], index: 0, kind: input, shape index: {}]
  %s1 = inlined_call_operand.hbm [shape: bf16[128,128], index: 1, kind: input, shape index: {}]
  %s2 = inlined_call_operand.vmem [shape: f32[1,128], index: 2, kind: input, shape index: {}]
  %s3 = inlined_call_operand.hbm [shape: bf16[128,128], index: 3, kind: input, shape index: {}]
  %s4 = inlined_call_operand.vmem [shape: f32[1,128], index: 4, kind: input, shape index: {}]
  %s5 = inlined_call_operand.vmem [shape: f32[16,128], index: 5, kind: output, shape index: {}]
  %s6 = sld [smem:[#allocation0]]
  $region42: #{_table_data_encoder_padded.1} parent=0
    _
  %s8 = ssub.s32 1, %s6
  %s9 = scalar_select 0, %s8, %s6
  $region1: #{_table_data_encoder_padded.1} parent=0
    #allocation3 [shape = 'u8[32768]{0}', space=vmem, size = 0x8000, scoped, tag = 'input window, operand 1, single buffered']
    #allocation4 [shape = 's32[1]{0}', space=sflag, size = 0x4, scoped, tag = 'scoped memory for _table_data_encoder_padded.1']
    #allocation5 [shape = 'u8[32768]{0}', space=vmem, size = 0x8000, scoped, tag = 'input window, operand 3, single buffered']
    #allocation6 [shape = 's32[1]{0}', space=sflag, size = 0x4, scoped, tag = 'scoped memory for _table_data_encoder_padded.1']
    %10 = vsyncpa [#allocation4], 0
    %11 = vsyncpa [#allocation6], 0
    // Predicated region
    $region2: #{_table_data_encoder_padded.1} parent=1 // pred_check
      _
    $region3: #{_table_data_encoder_padded.1} parent=1 // pred_check_branch
      %13 = sbr.rel (0) target = $region5
    $region4: #{_table_data_encoder_padded.1} parent=1 // pred_region
      _
    $region5: #{_table_data_encoder_padded.1} parent=1 // pred_fallthru
      _
    // Predicated region
    $region6: #{_table_data_encoder_padded.1} parent=1 // pred_check
      _
    $region7: #{_table_data_encoder_padded.1} parent=1 // pred_check_branch
      %15 = sbr.rel (0) target = $region9
    $region8: #{_table_data_encoder_padded.1} parent=1 // pred_region
      %s17 = ssub.s32 1024, 1024
      %18 = vsyncadd [#allocation4], %s17
      %s19 = sshll.u32 [#allocation3], 4
      %s20 = int_to_ptr.vmem [resolvable:$true] %s19
      %25 = dma.hbm_to_vmem [thread:$0]  %s1, 1024, %s20, [#allocation4], 64, 64, 4
    $region9: #{_table_data_encoder_padded.1} parent=1 // pred_fallthru
      _
    // Predicated region
    $region10: #{_table_data_encoder_padded.1} parent=1 // pred_check
      _
    $region11: #{_table_data_encoder_padded.1} parent=1 // pred_check_branch
      %27 = sbr.rel (0) target = $region13
    $region12: #{_table_data_encoder_padded.1} parent=1 // pred_region
      _
    $region13: #{_table_data_encoder_padded.1} parent=1 // pred_fallthru
      _
    // Predicated region
    $region14: #{_table_data_encoder_padded.1} parent=1 // pred_check
      _
    $region15: #{_table_data_encoder_padded.1} parent=1 // pred_check_branch
      %29 = sbr.rel (0) target = $region17
    $region16: #{_table_data_encoder_padded.1} parent=1 // pred_region
      %s31 = ssub.s32 1024, 1024
      %32 = vsyncadd [#allocation6], %s31
      %s33 = sshll.u32 [#allocation5], 4
      %s34 = int_to_ptr.vmem [resolvable:$true] %s33
      %39 = dma.hbm_to_vmem [thread:$0]  %s3, 1024, %s34, [#allocation6], 64, 64, 4
    $region17: #{_table_data_encoder_padded.1} parent=1 // pred_fallthru
      _
    // Predicated region
    $region18: #{_table_data_encoder_padded.1} parent=1 // pred_check
      _
    $region19: #{_table_data_encoder_padded.1} parent=1 // pred_check_branch
      %41 = sbr.rel (0) target = $region21
    $region20: #{_table_data_encoder_padded.1} parent=1 // pred_region
      _
    $region21: #{_table_data_encoder_padded.1} parent=1 // pred_fallthru
      _
    // Predicated region
    $region22: #{_table_data_encoder_padded.1} parent=1 // pred_check
      _
    $region23: #{_table_data_encoder_padded.1} parent=1 // pred_check_branch
      %43 = sbr.rel (0) target = $region25
    $region24: #{_table_data_encoder_padded.1} parent=1 // pred_region
      %44 = dma.done [#allocation4], 1024
    $region25: #{_table_data_encoder_padded.1} parent=1 // pred_fallthru
      _
    // Predicated region
    $region26: #{_table_data_encoder_padded.1} parent=1 // pred_check
      _
    $region27: #{_table_data_encoder_padded.1} parent=1 // pred_check_branch
      %46 = sbr.rel (0) target = $region29
    $region28: #{_table_data_encoder_padded.1} parent=1 // pred_region
      %47 = dma.done [#allocation6], 1024
    $region29: #{_table_data_encoder_padded.1} parent=1 // pred_fallthru
      _
    %p49 = scmp.eq.s32.totalorder 0, 0
    // Predicated region
    $region30: #{_table_data_encoder_padded.1} parent=1 // pred_check
      %p50 = pneg %p49
    $region31: #{_table_data_encoder_padded.1} parent=1 // pred_check_branch
      %52 = sbr.rel (%p50) target = $region33
    $region32: #{_table_data_encoder_padded.1} parent=1 // pred_region
      %v53 = vld [vmem:[%s0] sm:$0xf]
      %v54 = vld [vmem:[%s0 + $0x4] sm:$0xf]
      %v55 = vld [vmem:[#allocation3] sm:$0xf]
      %v56 = vld [vmem:[#allocation3 + $0x4] sm:$0xf]
      %v57 = vld [vmem:[#allocation3 + $0x8] sm:$0xf]
      %v58 = vld [vmem:[#allocation3 + $0xc] sm:$0xf]
      %v59 = vld [vmem:[#allocation3 + $0x10] sm:$0xf]
      %v60 = vld [vmem:[#allocation3 + $0x14] sm:$0xf]
      %v61 = vld [vmem:[#allocation3 + $0x18] sm:$0xf]
      %v62 = vld [vmem:[#allocation3 + $0x1c] sm:$0xf]
      %v63 = vld [vmem:[#allocation3 + $0x20] sm:$0xf]
      %v64 = vld [vmem:[#allocation3 + $0x24] sm:$0xf]
      %v65 = vld [vmem:[#allocation3 + $0x28] sm:$0xf]
      %v66 = vld [vmem:[#allocation3 + $0x2c] sm:$0xf]
      %v67 = vld [vmem:[#allocation3 + $0x30] sm:$0xf]
      %v68 = vld [vmem:[#allocation3 + $0x34] sm:$0xf]
      %v69 = vld [vmem:[#allocation3 + $0x38] sm:$0xf]
      %v70 = vld [vmem:[#allocation3 + $0x3c] sm:$0xf]
      %v71 = vld [vmem:[%s2] sm:$0x1]
      %v73 = vlaneseq
      %v74 = vshrl.u32 %v73, 7
      %v75 = vsub.s32 0, %v74
      %v76 = vrot.slane %v71, %v75
      %v80 = vunpack.c.l.b16 %v53
      %v81 = vunpack.c.l.b16 %v54
      %v82 = vpack.c.b16 %v81, %v80
      %v100 = vunpack.c.l.b16 %v55
      %v101 = vunpack.c.l.b16 %v56
      %v102 = vunpack.c.l.b16 %v57
      %v103 = vunpack.c.l.b16 %v58
      %v104 = vunpack.c.l.b16 %v59
      %v105 = vunpack.c.l.b16 %v60
      %v106 = vunpack.c.l.b16 %v61
      %v107 = vunpack.c.l.b16 %v62
      %v108 = vunpack.c.l.b16 %v63
      %v109 = vunpack.c.l.b16 %v64
      %v110 = vunpack.c.l.b16 %v65
      %v111 = vunpack.c.l.b16 %v66
      %v112 = vunpack.c.l.b16 %v67
      %v113 = vunpack.c.l.b16 %v68
      %v114 = vunpack.c.l.b16 %v69
      %v115 = vunpack.c.l.b16 %v70
      %v116 = vpack.c.b16 %v101, %v100
      %v117 = vpack.c.b16 %v103, %v102
      %v118 = vpack.c.b16 %v105, %v104
      %v119 = vpack.c.b16 %v107, %v106
      %v120 = vpack.c.b16 %v109, %v108
      %v121 = vpack.c.b16 %v111, %v110
      %v122 = vpack.c.b16 %v113, %v112
      %v123 = vpack.c.b16 %v115, %v114
      %132 = vmatprep.subr.bf16.mxu0 0
      %133 = vmatpush1.bf16.msra.mxu0 %v116
      %134 = vmatprep.subr.bf16.mxu0 0
      %135 = vmatpush1.bf16.msra.mxu0 %v117
      %136 = vmatprep.subr.bf16.mxu0 0
      %137 = vmatpush1.bf16.msra.mxu0 %v118
      %138 = vmatprep.subr.bf16.mxu0 0
      %139 = vmatpush1.bf16.msra.mxu0 %v119
      %140 = vmatprep.subr.bf16.mxu0 0
      %141 = vmatpush1.bf16.msra.mxu0 %v120
      %142 = vmatprep.subr.bf16.mxu0 0
      %143 = vmatpush1.bf16.msra.mxu0 %v121
      %144 = vmatprep.subr.bf16.mxu0 0
      %145 = vmatpush1.bf16.msra.mxu0 %v122
      %146 = vmatprep.subr.bf16.mxu0 0
      %147 = vmatpush1.bf16.msra.mxu0 %v123
      %148 = vmatprep.subr.bf16.mxu0 0
      %149 = vmatpush1.bf16.msra.mxu0 0
      %150 = vmatprep.subr.bf16.mxu0 0
      %151 = vmatpush1.bf16.msra.mxu0 0
      %152 = vmatprep.subr.bf16.mxu0 0
      %153 = vmatpush1.bf16.msra.mxu0 0
      %154 = vmatprep.subr.bf16.mxu0 0
      %155 = vmatpush1.bf16.msra.mxu0 0
      %156 = vmatprep.subr.bf16.mxu0 0
      %157 = vmatpush1.bf16.msra.mxu0 0
      %158 = vmatprep.subr.bf16.mxu0 0
      %159 = vmatpush1.bf16.msra.mxu0 0
      %160 = vmatprep.subr.bf16.mxu0 0
      %161 = vmatpush1.bf16.msra.mxu0 0
      %162 = vmatprep.subr.bf16.mxu0 0
      %163 = vmatpush1.bf16.msra.mxu0 0
      %164 = vmatprep.mubr.bf16.mxu0 0
      %165 = vmatmul.mubr.bf16.gmra.mrb[0].mxu0 %v82
      %v166 = vpop.f32.mrb[0].mxu0
      %v167 = vadd.f32 %v76, %v166
      %v168 = vpop.f32.mrb[0].mxu0
      %v169 = vpop.f32.mrb[0].mxu0
      %v170 = vadd.f32 %v76, %v169
      %v171 = vpop.f32.mrb[0].mxu0
      %172 = vdwg.mxu0
      %v173 = vmax.f32 %v167, 0.0
      %v174 = vmax.f32 %v170, 0.0
      %v175 = vpack.c.bf16 %v174, %v173
      %176 = vst [vmem:[#allocation2] sm:$0xff] %v175
    $region33: #{_table_data_encoder_padded.1} parent=1 // pred_fallthru
      _
    %v177 = vld [vmem:[#allocation2] sm:$0xff]
    %v178 = vld [vmem:[#allocation5] sm:$0xf]
    %v179 = vld [vmem:[#allocation5 + $0x4] sm:$0xf]
    %v180 = vld [vmem:[#allocation5 + $0x8] sm:$0xf]
    %v181 = vld [vmem:[#allocation5 + $0xc] sm:$0xf]
    %v182 = vld [vmem:[#allocation5 + $0x10] sm:$0xf]
    %v183 = vld [vmem:[#allocation5 + $0x14] sm:$0xf]
    %v184 = vld [vmem:[#allocation5 + $0x18] sm:$0xf]
    %v185 = vld [vmem:[#allocation5 + $0x1c] sm:$0xf]
    %v186 = vld [vmem:[#allocation5 + $0x20] sm:$0xf]
    %v187 = vld [vmem:[#allocation5 + $0x24] sm:$0xf]
    %v188 = vld [vmem:[#allocation5 + $0x28] sm:$0xf]
    %v189 = vld [vmem:[#allocation5 + $0x2c] sm:$0xf]
    %v190 = vld [vmem:[#allocation5 + $0x30] sm:$0xf]
    %v191 = vld [vmem:[#allocation5 + $0x34] sm:$0xf]
    %v192 = vld [vmem:[#allocation5 + $0x38] sm:$0xf]
    %v193 = vld [vmem:[#allocation5 + $0x3c] sm:$0xf]
    %v194 = vld [vmem:[%s4] sm:$0x1]
    %v196 = vlaneseq
    %v197 = vshrl.u32 %v196, 7
    %v198 = vsub.s32 0, %v197
    %v199 = vrot.slane %v194, %v198
    %v217 = vunpack.c.l.b16 %v178
    %v218 = vunpack.c.l.b16 %v179
    %v219 = vunpack.c.l.b16 %v180
    %v220 = vunpack.c.l.b16 %v181
    %v221 = vunpack.c.l.b16 %v182
    %v222 = vunpack.c.l.b16 %v183
    %v223 = vunpack.c.l.b16 %v184
    %v224 = vunpack.c.l.b16 %v185
    %v225 = vunpack.c.l.b16 %v186
    %v226 = vunpack.c.l.b16 %v187
    %v227 = vunpack.c.l.b16 %v188
    %v228 = vunpack.c.l.b16 %v189
    %v229 = vunpack.c.l.b16 %v190
    %v230 = vunpack.c.l.b16 %v191
    %v231 = vunpack.c.l.b16 %v192
    %v232 = vunpack.c.l.b16 %v193
    %v233 = vpack.c.b16 %v218, %v217
    %v234 = vpack.c.b16 %v220, %v219
    %v235 = vpack.c.b16 %v222, %v221
    %v236 = vpack.c.b16 %v224, %v223
    %v237 = vpack.c.b16 %v226, %v225
    %v238 = vpack.c.b16 %v228, %v227
    %v239 = vpack.c.b16 %v230, %v229
    %v240 = vpack.c.b16 %v232, %v231
    %249 = vmatprep.subr.bf16.mxu0 0
    %250 = vmatpush1.bf16.msra.mxu0 %v233
    %251 = vmatprep.subr.bf16.mxu0 0
    %252 = vmatpush1.bf16.msra.mxu0 %v234
    %253 = vmatprep.subr.bf16.mxu0 0
    %254 = vmatpush1.bf16.msra.mxu0 %v235
    %255 = vmatprep.subr.bf16.mxu0 0
    %256 = vmatpush1.bf16.msra.mxu0 %v236
    %257 = vmatprep.subr.bf16.mxu0 0
    %258 = vmatpush1.bf16.msra.mxu0 %v237
    %259 = vmatprep.subr.bf16.mxu0 0
    %260 = vmatpush1.bf16.msra.mxu0 %v238
    %261 = vmatprep.subr.bf16.mxu0 0
    %262 = vmatpush1.bf16.msra.mxu0 %v239
    %263 = vmatprep.subr.bf16.mxu0 0
    %264 = vmatpush1.bf16.msra.mxu0 %v240
    %265 = vmatprep.subr.bf16.mxu0 0
    %266 = vmatpush1.bf16.msra.mxu0 0
    %267 = vmatprep.subr.bf16.mxu0 0
    %268 = vmatpush1.bf16.msra.mxu0 0
    %269 = vmatprep.subr.bf16.mxu0 0
    %270 = vmatpush1.bf16.msra.mxu0 0
    %271 = vmatprep.subr.bf16.mxu0 0
    %272 = vmatpush1.bf16.msra.mxu0 0
    %273 = vmatprep.subr.bf16.mxu0 0
    %274 = vmatpush1.bf16.msra.mxu0 0
    %275 = vmatprep.subr.bf16.mxu0 0
    %276 = vmatpush1.bf16.msra.mxu0 0
    %277 = vmatprep.subr.bf16.mxu0 0
    %278 = vmatpush1.bf16.msra.mxu0 0
    %279 = vmatprep.subr.bf16.mxu0 0
    %280 = vmatpush1.bf16.msra.mxu0 0
    %281 = vmatprep.mubr.bf16.mxu0 0
    %282 = vmatmul.mubr.bf16.gmra.mrb[0].mxu0 %v177
    %v283 = vpop.f32.mrb[0].mxu0
    %v284 = vadd.f32 %v199, %v283
    %v285 = vpop.f32.mrb[0].mxu0
    %v286 = vpop.f32.mrb[0].mxu0
    %v287 = vadd.f32 %v199, %v286
    %v288 = vpop.f32.mrb[0].mxu0
    %289 = vdwg.mxu0
    %v290 = vmax.f32 %v284, 0.0
    %v291 = vmax.f32 %v287, 0.0
    %292 = vst [vmem:[%s5] sm:$0xff] %v290
    %293 = vst [vmem:[%s5 + $0x8] sm:$0xff] %v291
    // Predicated region
    $region34: #{_table_data_encoder_padded.1} parent=1 // pred_check
      _
    $region35: #{_table_data_encoder_padded.1} parent=1 // pred_check_branch
      %295 = sbr.rel (0) target = $region37
    $region36: #{_table_data_encoder_padded.1} parent=1 // pred_region
      _
    $region37: #{_table_data_encoder_padded.1} parent=1 // pred_fallthru
      _
    // Predicated region
    $region38: #{_table_data_encoder_padded.1} parent=1 // pred_check
      _
    $region39: #{_table_data_encoder_padded.1} parent=1 // pred_check_branch
      %297 = sbr.rel (0) target = $region41
    $region40: #{_table_data_encoder_padded.1} parent=1 // pred_region
      _
    $region41: #{_table_data_encoder_padded.1} parent=1 // pred_fallthru
      _
    %298 = vsyncpa [#allocation4], 1
    %299 = vsyncpa [#allocation6], 1

</llo_original>
